<compile_context>
chip_gen: v5e
topology: v5e:2x2
jax: 0.10.0
libtpu: 0.0.40
codegen_flags: <defaults>
</compile_context>

<pallas_src>
import numpy as np

import jax
import jax.numpy as jnp
from jax.experimental import pallas as pl
from jax.experimental.pallas import tpu as pltpu

_SQRT_2_OVER_PI = 0.7978845608028654


def _gelu_tanh_f32(h):
    # torch.nn.GELU(approximate='tanh'), computed in f32.
    return 0.5 * h * (1.0 + jnp.tanh(_SQRT_2_OVER_PI * (h + 0.044715 * (h * h * h))))


# ----------------------------------------------------------------------------
# Kernels
# ----------------------------------------------------------------------------
def _mlp_kernel_resident(x_ref, w1_ref, b1_ref, w2_ref, b2_ref, o_ref):
    # Full weights resident in VMEM (grid-invariant); 1-D grid over row tiles.
    # x_ref: (tm, C)  w1_ref: (C, H)  b1_ref: (1, H)  w2_ref: (H, C)  b2_ref: (1, C)
    h = jnp.dot(x_ref[...], w1_ref[...], preferred_element_type=jnp.float32)
    h = h + b1_ref[...].astype(jnp.float32)
    h = _gelu_tanh_f32(h)
    o = jnp.dot(h.astype(w2_ref.dtype), w2_ref[...],
                preferred_element_type=jnp.float32)
    o_ref[...] = (o + b2_ref[...].astype(jnp.float32)).astype(o_ref.dtype)


def _mlp_kernel_htiled(x_ref, w1_ref, b1_ref, w2_ref, b2_ref, o_ref, acc_ref):
    # Hidden dim tiled (for large C): 2-D grid (row tiles, hidden tiles).
    # acc_ref carries the partial c_proj sum in f32 across the hidden axis.
    hk = pl.program_id(1)

    h = jnp.dot(x_ref[...], w1_ref[...], preferred_element_type=jnp.float32)
    h = h + b1_ref[...].astype(jnp.float32)
    h = _gelu_tanh_f32(h)
    p = jnp.dot(h.astype(w2_ref.dtype), w2_ref[...],
                preferred_element_type=jnp.float32)

    # Initialize with the first partial product (saves a zero-store + add).
    @pl.when(hk == 0)
    def _():
        acc_ref[...] = p

    @pl.when(hk > 0)
    def _():
        acc_ref[...] += p

    @pl.when(hk == pl.num_programs(1) - 1)
    def _():
        o_ref[...] = (acc_ref[...] + b2_ref[...].astype(jnp.float32)
                      ).astype(o_ref.dtype)


# ----------------------------------------------------------------------------
# Wrapper
# ----------------------------------------------------------------------------
def _round_up(x, m):
    return (x + m - 1) // m * m


def _pick_th(H, th_max):
    """Largest multiple of 128 that divides H, capped at th_max (or None)."""
    best = None
    t = 128
    cap = min(H, th_max)
    while t <= cap:
        if H % t == 0:
            best = t
        t += 128
    return best


def prepare_mlp_params(w_fc, b_fc, w_proj, b_proj, *, compute_dtype=jnp.bfloat16):
    """Cast/reshape parameters once at load time (hoisted out of the hot path)."""
    return (w_fc.astype(compute_dtype),
            b_fc.reshape(1, -1).astype(jnp.float32),
            w_proj.astype(compute_dtype),
            b_proj.reshape(1, -1).astype(jnp.float32))


def mlp_pallas(x, w_fc, b_fc, w_proj, b_proj, *, tm=1024, th=1024,
               compute_dtype=jnp.bfloat16, force_h_tiling=False,
               vmem_budget_bytes=None):
    """x: (B, T, C). w_fc: (C, 4C), b_fc: (4C,)|(1,4C), w_proj: (4C, C), b_proj: (C,)|(1,C)."""
    B, T, C = x.shape
    H = w_fc.shape[1]
    assert w_fc.shape == (C, H) and w_proj.shape == (H, C)
    assert b_fc.size == H and b_proj.size == C
    out_dtype = x.dtype
    cdb = np.dtype(compute_dtype).itemsize
    outb = np.dtype(out_dtype).itemsize

    M = B * T
    x2 = x.reshape(M, C)
    if x2.dtype != compute_dtype:
        x2 = x2.astype(compute_dtype)

    # Parameters: cast only if the caller did not pre-cast (prefer prepare_mlp_params).
    w1 = w_fc if w_fc.dtype == compute_dtype else w_fc.astype(compute_dtype)
    w2 = w_proj if w_proj.dtype == compute_dtype else w_proj.astype(compute_dtype)
    b1 = b_fc.reshape(1, H)
    b2 = b_proj.reshape(1, C)
    if b1.dtype != jnp.float32:
        b1 = b1.astype(jnp.float32)
    if b2.dtype != jnp.float32:
        b2 = b2.astype(jnp.float32)

    # ---------------- generation-aware VMEM budget ----------------
    if vmem_budget_bytes is None:
        try:
            vmem_cap = int(pltpu.get_tpu_info().vmem_capacity_bytes)
        except Exception:
            vmem_cap = 64 * 1024 * 1024  # conservative: v7x physical VMEM / TC
        vmem_budget_bytes = min(int(vmem_cap * 0.85), 100 * 1024 * 1024)
    budget = max(int(vmem_budget_bytes), 32 * 1024 * 1024)

    # Working-set estimates (double-buffered operands + hidden f32/bf16 temps).
    def resident_bytes(tm_):
        return (2 * tm_ * C * cdb            # x tile
                + 2 * tm_ * C * outb         # out tile
                + 2 * 2 * C * H * cdb        # W_fc + W_proj (counted 2-buffered)
                + 2 * (H + C) * 4            # biases
                + tm_ * H * (4 + cdb))       # f32 hidden + bf16 cast temporaries

    def htiled_bytes(tm_, th_):
        return (2 * tm_ * C * cdb
                + 2 * tm_ * C * outb
                + tm_ * C * 4                # f32 accumulator scratch
                + 2 * 2 * C * th_ * cdb      # W_fc & W_proj slices
                + 2 * (th_ + C) * 4
                + tm_ * th_ * (4 + cdb))

    # ---------------- tile / path selection ----------------
    tm_req = max(8, min(tm, _round_up(M, 8)))

    use_resident = False
    if not force_h_tiling:
        tm_r = tm_req
        while resident_bytes(tm_r) > budget and tm_r > 256:
            tm_r = max(256, tm_r // 2)
        if resident_bytes(tm_r) <= budget:
            use_resident, tm = True, tm_r

    if use_resident:
        # v7x megacore: keep >= 2 row tiles so both TensorCores get work
        # (weights are fetched once regardless, so this costs no extra HBM).
        if tm >= M and M > 512:
            tm = _round_up((M + 1) // 2, 8)
    else:
        tm = tm_req
        # Largest 128-multiple dividing H; fall back to full H only if none
        # exists (H = 4*n_embd is a multiple of 128 for all realistic configs).
        th_sel = _pick_th(H, th) or H
        while htiled_bytes(tm, th_sel) > budget:
            if tm > 256:
                tm = max(256, tm // 2)
                continue
            smaller = _pick_th(H, th_sel - 128) if th_sel > 128 else None
            if smaller is None:
                break  # best effort; scoped VMEM limit below is the backstop
            th_sel = smaller
        th = th_sel

    pad = (-M) % tm
    Mp = M + pad
    if pad:
        x2 = jnp.pad(x2, ((0, pad), (0, 0)))
    n_row_tiles = Mp // tm

    # ---------------- cost estimate (accounts for weight streaming) ----------
    weight_passes = 1 if use_resident else n_row_tiles
    bytes_accessed = (Mp * C * cdb                      # x
                      + Mp * C * outb                   # out
                      + weight_passes * 2 * C * H * cdb  # weights (re-)streamed
                      + (H + C) * 4)                    # biases
    cost = pl.CostEstimate(flops=4 * Mp * C * H,
                           transcendentals=Mp * H,
                           bytes_accessed=int(bytes_accessed))

    # ---------------- pallas_call ----------------
    if use_resident:
        out2 = pl.pallas_call(
            _mlp_kernel_resident,
            out_shape=jax.ShapeDtypeStruct((Mp, C), out_dtype),
            grid_spec=pltpu.PrefetchScalarGridSpec(
                num_scalar_prefetch=0,
                grid=(n_row_tiles,),
                in_specs=[
                    pl.BlockSpec((tm, C), lambda i: (i, 0)),   # x row tile
                    pl.BlockSpec((C, H), lambda i: (0, 0)),    # W_fc (resident)
                    pl.BlockSpec((1, H), lambda i: (0, 0)),    # b_fc
                    pl.BlockSpec((H, C), lambda i: (0, 0)),    # W_proj (resident)
                    pl.BlockSpec((1, C), lambda i: (0, 0)),    # b_proj
                ],
                out_specs=pl.BlockSpec((tm, C), lambda i: (i, 0)),
            ),
            compiler_params=pltpu.CompilerParams(
                dimension_semantics=("parallel",),
                vmem_limit_bytes=int(budget),
            ),
            cost_estimate=cost,
        )(x2, w1, b1, w2, b2)
    else:
        assert H % th == 0
        out2 = pl.pallas_call(
            _mlp_kernel_htiled,
            out_shape=jax.ShapeDtypeStruct((Mp, C), out_dtype),
            grid_spec=pltpu.PrefetchScalarGridSpec(
                num_scalar_prefetch=0,
                grid=(n_row_tiles, H // th),
                in_specs=[
                    pl.BlockSpec((tm, C), lambda i, k: (i, 0)),   # x (k-invariant)
                    pl.BlockSpec((C, th), lambda i, k: (0, k)),   # W_fc slice
                    pl.BlockSpec((1, th), lambda i, k: (0, k)),   # b_fc slice
                    pl.BlockSpec((th, C), lambda i, k: (k, 0)),   # W_proj slice
                    pl.BlockSpec((1, C), lambda i, k: (0, 0)),    # b_proj
                ],
                out_specs=pl.BlockSpec((tm, C), lambda i, k: (i, 0)),
                scratch_shapes=[pltpu.VMEM((tm, C), jnp.float32)],
            ),
            compiler_params=pltpu.CompilerParams(
                dimension_semantics=("parallel", "arbitrary"),
                vmem_limit_bytes=int(budget),
            ),
            cost_estimate=cost,
        )(x2, w1, b1, w2, b2)

    if pad:
        out2 = out2[:M]
    return out2.reshape(B, T, C)


# ----------------------------------------------------------------------------
# Pure-JAX reference
# ----------------------------------------------------------------------------
def _reference_mlp(x, w_fc, b_fc, w_proj, b_proj, *, compute_dtype=jnp.float32):
    cd = compute_dtype
    h = jnp.dot(x.astype(cd), w_fc.astype(cd),
                preferred_element_type=jnp.float32) + b_fc
    h = _gelu_tanh_f32(h)
    out = jnp.dot(h.astype(cd), w_proj.astype(cd),
                  preferred_element_type=jnp.float32) + b_proj
    return out.astype(x.dtype)


if __name__ == "__main__":
    key = jax.random.PRNGKey(0)

    def make_case(k, B, T, C):
        H = 4 * C
        kx, k1, k2, k3, k4 = jax.random.split(k, 5)
        x = jax.random.normal(kx, (B, T, C), dtype=jnp.float32)
        w_fc = jax.random.normal(k1, (C, H), dtype=jnp.float32) * 0.02
        b_fc = jax.random.normal(k2, (H,), dtype=jnp.float32) * 0.02
        w_proj = jax.random.normal(k3, (H, C), dtype=jnp.float32) * 0.02
        b_proj = jax.random.normal(k4, (C,), dtype=jnp.float32) * 0.02
        return x, (w_fc, b_fc, w_proj, b_proj)

    def check(out, x, params):
        assert out.shape == x.shape and out.dtype == x.dtype
        ref_bf16 = _reference_mlp(x, *params, compute_dtype=jnp.bfloat16)
        ref_f32 = _reference_mlp(x, *params, compute_dtype=jnp.float32)
        assert jnp.allclose(out, ref_bf16, atol=1e-3, rtol=1e-3), (
            float(jnp.max(jnp.abs(out - ref_bf16))))
        assert jnp.allclose(out, ref_f32, atol=2e-2, rtol=2e-2), (
            float(jnp.max(jnp.abs(out - ref_f32))))

    ka, kb = jax.random.split(key)

    # Case A: tiny GPT-2-like config (B=2, T=8, n_embd=32) -> weight-resident path.
    x, params = make_case(ka, 2, 8, 32)
    pp = prepare_mlp_params(*params)
    out = jax.block_until_ready(mlp_pallas(x, *pp))
    check(out, x, params)

    # Case B: B=4, T=64, n_embd=128 -> resident path at larger tiles.
    x, params = make_case(kb, 4, 64, 128)
    pp = prepare_mlp_params(*params)
    out = jax.block_until_ready(mlp_pallas(x, *pp))
    check(out, x, params)

    # Case B again, forcing the H-tiled accumulator path on a real (2, 2) grid.
    out = jax.block_until_ready(
        mlp_pallas(x, *pp, tm=128, th=256, force_h_tiling=True))
    check(out, x, params)

    print("KERNEL_OK")
</pallas_src>

<mosaic_0001>
module attributes {stable_mosaic.version = 11 : i64} {
  func.func @_mlp_kernel_resident(%arg0: i32, %arg1: memref<16x32xbf16, #tpu.memory_space<vmem>>, %arg2: memref<32x128xbf16, #tpu.memory_space<vmem>>, %arg3: memref<1x128xf32, #tpu.memory_space<vmem>>, %arg4: memref<128x32xbf16, #tpu.memory_space<vmem>>, %arg5: memref<1x32xf32, #tpu.memory_space<vmem>>, %arg6: memref<16x32xf32, #tpu.memory_space<vmem>>) attributes {dimension_semantics = [#tpu.dimension_semantics<parallel>], iteration_bounds = array<i64: 1>, scalar_prefetch = 0 : i64, scratch_operands = 0 : i64, tpu.core_type = #tpu.core_type<tc>, window_params = [{transform_indices = @transform_0, window_bounds = array<i64: 16, 32>}, {pipeline_mode = #tpu.pipeline_mode<synchronous>, transform_indices = @transform_1, window_bounds = array<i64: 32, 128>}, {pipeline_mode = #tpu.pipeline_mode<synchronous>, transform_indices = @transform_2, window_bounds = array<i64: 1, 128>}, {pipeline_mode = #tpu.pipeline_mode<synchronous>, transform_indices = @transform_3, window_bounds = array<i64: 128, 32>}, {pipeline_mode = #tpu.pipeline_mode<synchronous>, transform_indices = @transform_4, window_bounds = array<i64: 1, 32>}, {transform_indices = @transform_5, window_bounds = array<i64: 16, 32>}]} {
    %c0 = arith.constant 0 : index
    %c0_0 = arith.constant 0 : index
    %0 = vector.load %arg1[%c0, %c0_0] : memref<16x32xbf16, #tpu.memory_space<vmem>>, vector<16x32xbf16>
    %c0_1 = arith.constant 0 : index
    %c0_2 = arith.constant 0 : index
    %1 = vector.load %arg2[%c0_1, %c0_2] : memref<32x128xbf16, #tpu.memory_space<vmem>>, vector<32x128xbf16>
    %cst = arith.constant dense<0.000000e+00> : vector<16x128xf32>
    %2 = tpu.matmul %0, %1, %cst {dimension_numbers = #tpu.dot_dimension_numbers<[1], [0], [0], [1], [0, 0, 1, 1], [], []>} : vector<16x32xbf16>, vector<32x128xbf16>, vector<16x128xf32> -> vector<16x128xf32>
    %c0_3 = arith.constant 0 : index
    %c0_4 = arith.constant 0 : index
    %3 = vector.load %arg3[%c0_3, %c0_4] : memref<1x128xf32, #tpu.memory_space<vmem>>, vector<1x128xf32>
    %4 = vector.broadcast %3 : vector<1x128xf32> to vector<16x128xf32>
    %5 = arith.addf %2, %4 : vector<16x128xf32>
    %cst_5 = arith.constant 5.000000e-01 : f32
    %6 = vector.broadcast %cst_5 : f32 to vector<16x128xf32>
    %7 = arith.mulf %6, %5 : vector<16x128xf32>
    %8 = arith.mulf %5, %5 : vector<16x128xf32>
    %9 = arith.mulf %8, %5 : vector<16x128xf32>
    %cst_6 = arith.constant 4.471500e-02 : f32
    %10 = vector.broadcast %cst_6 : f32 to vector<16x128xf32>
    %11 = arith.mulf %10, %9 : vector<16x128xf32>
    %12 = arith.addf %5, %11 : vector<16x128xf32>
    %cst_7 = arith.constant 0.797884583 : f32
    %13 = vector.broadcast %cst_7 : f32 to vector<16x128xf32>
    %14 = arith.mulf %13, %12 : vector<16x128xf32>
    %15 = math.tanh %14 : vector<16x128xf32>
    %cst_8 = arith.constant 1.000000e+00 : f32
    %16 = vector.broadcast %cst_8 : f32 to vector<16x128xf32>
    %17 = arith.addf %16, %15 : vector<16x128xf32>
    %18 = arith.mulf %7, %17 : vector<16x128xf32>
    %19 = arith.truncf %18 : vector<16x128xf32> to vector<16x128xbf16>
    %c0_9 = arith.constant 0 : index
    %c0_10 = arith.constant 0 : index
    %20 = vector.load %arg4[%c0_9, %c0_10] : memref<128x32xbf16, #tpu.memory_space<vmem>>, vector<128x32xbf16>
    %cst_11 = arith.constant dense<0.000000e+00> : vector<16x32xf32>
    %21 = tpu.matmul %19, %20, %cst_11 {dimension_numbers = #tpu.dot_dimension_numbers<[1], [0], [0], [1], [0, 0, 1, 1], [], []>} : vector<16x128xbf16>, vector<128x32xbf16>, vector<16x32xf32> -> vector<16x32xf32>
    %c0_12 = arith.constant 0 : index
    %c0_13 = arith.constant 0 : index
    %22 = vector.load %arg5[%c0_12, %c0_13] : memref<1x32xf32, #tpu.memory_space<vmem>>, vector<1x32xf32>
    %23 = vector.broadcast %22 : vector<1x32xf32> to vector<16x32xf32>
    %24 = arith.addf %21, %23 : vector<16x32xf32>
    %c0_14 = arith.constant 0 : index
    %c0_15 = arith.constant 0 : index
    %25 = vector.load %arg6[%c0_14, %c0_15] : memref<16x32xf32, #tpu.memory_space<vmem>>, vector<16x32xf32>
    tpu.vector_store %arg6[%c0_14, %c0_15], %24 {strides = array<i32>} : memref<16x32xf32, #tpu.memory_space<vmem>>, vector<16x32xf32>,
    return
  }
  func.func @transform_0(%arg0: i32) -> (i32, i32) {
    %c0_i32 = arith.constant 0 : i32
    %c0_i32_0 = arith.constant 0 : i32
    return %arg0, %c0_i32 : i32, i32
  }
  func.func @transform_1(%arg0: i32) -> (i32, i32) {
    %c0_i32 = arith.constant 0 : i32
    %c0_i32_0 = arith.constant 0 : i32
    %c0_i32_1 = arith.constant 0 : i32
    return %c0_i32, %c0_i32_0 : i32, i32
  }
  func.func @transform_2(%arg0: i32) -> (i32, i32) {
    %c0_i32 = arith.constant 0 : i32
    %c0_i32_0 = arith.constant 0 : i32
    %c0_i32_1 = arith.constant 0 : i32
    return %c0_i32, %c0_i32_0 : i32, i32
  }
  func.func @transform_3(%arg0: i32) -> (i32, i32) {
    %c0_i32 = arith.constant 0 : i32
    %c0_i32_0 = arith.constant 0 : i32
    %c0_i32_1 = arith.constant 0 : i32
    return %c0_i32, %c0_i32_0 : i32, i32
  }
  func.func @transform_4(%arg0: i32) -> (i32, i32) {
    %c0_i32 = arith.constant 0 : i32
    %c0_i32_0 = arith.constant 0 : i32
    %c0_i32_1 = arith.constant 0 : i32
    return %c0_i32, %c0_i32_0 : i32, i32
  }
  func.func @transform_5(%arg0: i32) -> (i32, i32) {
    %c0_i32 = arith.constant 0 : i32
    %c0_i32_0 = arith.constant 0 : i32
    return %arg0, %c0_i32 : i32, i32
  }
}

</mosaic_0001>

<llo_original>
// kernel: tpu_custom_call.1
$region0: #{tpu_custom_call.1}
  #allocation0 [shape = 'u32[]', space=smem, size = 0x4, offset = 0x4, fixed_abs, tag = 'smem constant byte address 0x4 - core index']
  #allocation1 [shape = 'u32[72,128]{1,0:T(1,128)}', space=vmem, size = 0x9000, scoped, tag = 'internal scratch']
  %s0 = inlined_call_operand.vmem [shape: bf16[16,32], index: 0, kind: input, shape index: {}]
  %s1 = inlined_call_operand.vmem [shape: bf16[32,128], index: 1, kind: input, shape index: {}]
  %s2 = inlined_call_operand.vmem [shape: f32[1,128], index: 2, kind: input, shape index: {}]
  %s3 = inlined_call_operand.vmem [shape: bf16[128,32], index: 3, kind: input, shape index: {}]
  %s4 = inlined_call_operand.vmem [shape: f32[1,32], index: 4, kind: input, shape index: {}]
  %s5 = inlined_call_operand.hbm [shape: f32[16,32], index: 5, kind: output, shape index: {}]
  %s6 = sld [smem:[#allocation0]]
  $region30: #{tpu_custom_call.1} parent=0
    _
  %s8 = ssub.s32 1, %s6
  %s9 = scalar_select 0, %s8, %s6
  $region1: #{tpu_custom_call.1} parent=0
    #allocation2 [shape = 'u8[8192]{0}', space=vmem, size = 0x2000, scoped, tag = 'output window, operand 0, single buffered']
    #allocation3 [shape = 's32[1]{0}', space=sflag, size = 0x4, scoped, tag = 'scoped memory for tpu_custom_call.1']
    %10 = vsyncpa [#allocation3], 0
    // Predicated region
    $region2: #{tpu_custom_call.1} parent=1 // pred_check
      _
    $region3: #{tpu_custom_call.1} parent=1 // pred_check_branch
      %12 = sbr.rel (0) target = $region5
    $region4: #{tpu_custom_call.1} parent=1 // pred_region
      _
    $region5: #{tpu_custom_call.1} parent=1 // pred_fallthru
      _
    // Predicated region
    $region6: #{tpu_custom_call.1} parent=1 // pred_check
      _
    $region7: #{tpu_custom_call.1} parent=1 // pred_check_branch
      %14 = sbr.rel (0) target = $region9
    $region8: #{tpu_custom_call.1} parent=1 // pred_region
      _
    $region9: #{tpu_custom_call.1} parent=1 // pred_fallthru
      _
    // Predicated region
    $region10: #{tpu_custom_call.1} parent=1 // pred_check
      _
    $region11: #{tpu_custom_call.1} parent=1 // pred_check_branch
      %16 = sbr.rel (0) target = $region13
    $region12: #{tpu_custom_call.1} parent=1 // pred_region
      _
    $region13: #{tpu_custom_call.1} parent=1 // pred_fallthru
      _
    // Predicated region
    $region14: #{tpu_custom_call.1} parent=1 // pred_check
      _
    $region15: #{tpu_custom_call.1} parent=1 // pred_check_branch
      %18 = sbr.rel (0) target = $region17
    $region16: #{tpu_custom_call.1} parent=1 // pred_region
      _
    $region17: #{tpu_custom_call.1} parent=1 // pred_fallthru
      _
    // Predicated region
    $region18: #{tpu_custom_call.1} parent=1 // pred_check
      _
    $region19: #{tpu_custom_call.1} parent=1 // pred_check_branch
      %20 = sbr.rel (0) target = $region21
    $region20: #{tpu_custom_call.1} parent=1 // pred_region
      _
    $region21: #{tpu_custom_call.1} parent=1 // pred_fallthru
      _
    %v22 = vld [vmem:[%s0] sm:$0xf]
    %v23 = vld [vmem:[%s0 + $0x4] sm:$0xf]
    %v24 = vld [vmem:[%s1] sm:$0xf]
    %v25 = vld [vmem:[%s1 + $0x4] sm:$0xf]
    %v26 = vld [vmem:[%s1 + $0x8] sm:$0xf]
    %v27 = vld [vmem:[%s1 + $0xc] sm:$0xf]
    %v28 = vld [vmem:[%s2] sm:$0x1]
    %v30 = vperm.slane %v28, 0
    %v34 = vunpack.c.l.b16 %v22
    %v35 = vunpack.c.l.b16 %v23
    %v36 = vpack.c.b16 %v35, %v34
    %v41 = vunpack.c.l.b16 %v24
    %v42 = vunpack.c.l.b16 %v25
    %v43 = vunpack.c.l.b16 %v26
    %v44 = vunpack.c.l.b16 %v27
    %v45 = vpack.c.b16 %v42, %v41
    %v46 = vpack.c.b16 %v44, %v43
    %vm49 = vcmask 261120
    %v51 = vsel %vm49, %v36, 0
    %53 = vmatpush.bf16.msra.mxu0 0
    %54 = vmatpush.bf16.msra.mxu0 0
    %55 = vmatpush.bf16.msra.mxu0 0
    %56 = vmatpush.bf16.msra.mxu0 0
    %57 = vmatpush.bf16.msra.mxu0 0
    %58 = vmatpush.bf16.msra.mxu0 0
    %59 = vmatpush.bf16.msra.mxu0 %v46
    %60 = vmatpush.bf16.msra.mxu0 %v45
    %61 = vmatmul.bf16.gmra.mxu0 %v51
    %v62 = vpop.f32.mrf.mxu0
    %v63 = vadd.f32 %v30, %v62
    %v64 = vpop.f32.mrf.mxu0
    %v65 = vadd.f32 %v30, %v64
    %66 = vdwg.mxu0
    %v67 = vmul.f32 %v63, 0.5
    %v68 = vmul.f32 %v65, 0.5
    %v69 = vmul.f32 %v63, %v63
    %v70 = vmul.f32 %v65, %v65
    %v71 = vmul.f32 %v69, %v63
    %v72 = vmul.f32 %v70, %v65
    %v73 = vmul.f32 %v71, 0.044715
    %v74 = vmul.f32 %v72, 0.044715
    %v75 = vadd.f32 %v63, %v73
    %v76 = vadd.f32 %v65, %v74
    %v77 = vmul.f32 %v75, 0.7978846
    %v78 = vmul.f32 %v76, 0.7978846
    %v79 = vtanh.pop %v77
    %v80 = vtanh.pop %v78
    %v81 = vadd.f32 %v79, 1.0
    %v82 = vadd.f32 %v80, 1.0
    %v83 = vmul.f32 %v67, %v81
    %v84 = vmul.f32 %v68, %v82
    %v85 = vpack.c.bf16 %v84, %v83
    %v86 = vld [vmem:[%s3] sm:$0xf]
    %v87 = vld [vmem:[%s3 + $0x4] sm:$0xf]
    %v88 = vld [vmem:[%s3 + $0x8] sm:$0xf]
    %v89 = vld [vmem:[%s3 + $0xc] sm:$0xf]
    %v90 = vld [vmem:[%s3 + $0x10] sm:$0xf]
    %v91 = vld [vmem:[%s3 + $0x14] sm:$0xf]
    %v92 = vld [vmem:[%s3 + $0x18] sm:$0xf]
    %v93 = vld [vmem:[%s3 + $0x1c] sm:$0xf]
    %v94 = vld [vmem:[%s3 + $0x20] sm:$0xf]
    %v95 = vld [vmem:[%s3 + $0x24] sm:$0xf]
    %v96 = vld [vmem:[%s3 + $0x28] sm:$0xf]
    %v97 = vld [vmem:[%s3 + $0x2c] sm:$0xf]
    %v98 = vld [vmem:[%s3 + $0x30] sm:$0xf]
    %v99 = vld [vmem:[%s3 + $0x34] sm:$0xf]
    %v100 = vld [vmem:[%s3 + $0x38] sm:$0xf]
    %v101 = vld [vmem:[%s3 + $0x3c] sm:$0xf]
    %v102 = vld [vmem:[%s4] sm:$0x1]
    %v104 = vperm.slane %v102, 0
    %v122 = vunpack.c.l.b16 %v86
    %v123 = vunpack.c.l.b16 %v87
    %v124 = vunpack.c.l.b16 %v88
    %v125 = vunpack.c.l.b16 %v89
    %v126 = vunpack.c.l.b16 %v90
    %v127 = vunpack.c.l.b16 %v91
    %v128 = vunpack.c.l.b16 %v92
    %v129 = vunpack.c.l.b16 %v93
    %v130 = vunpack.c.l.b16 %v94
    %v131 = vunpack.c.l.b16 %v95
    %v132 = vunpack.c.l.b16 %v96
    %v133 = vunpack.c.l.b16 %v97
    %v134 = vunpack.c.l.b16 %v98
    %v135 = vunpack.c.l.b16 %v99
    %v136 = vunpack.c.l.b16 %v100
    %v137 = vunpack.c.l.b16 %v101
    %v138 = vpack.c.b16 %v123, %v122
    %v139 = vpack.c.b16 %v125, %v124
    %v140 = vpack.c.b16 %v127, %v126
    %v141 = vpack.c.b16 %v129, %v128
    %v142 = vpack.c.b16 %v131, %v130
    %v143 = vpack.c.b16 %v133, %v132
    %v144 = vpack.c.b16 %v135, %v134
    %v145 = vpack.c.b16 %v137, %v136
    %154 = vmatpush.bf16.msra.mxu0 %v145
    %155 = vmatpush.bf16.msra.mxu0 %v144
    %156 = vmatpush.bf16.msra.mxu0 %v143
    %157 = vmatpush.bf16.msra.mxu0 %v142
    %158 = vmatpush.bf16.msra.mxu0 %v141
    %159 = vmatpush.bf16.msra.mxu0 %v140
    %160 = vmatpush.bf16.msra.mxu0 %v139
    %161 = vmatpush.bf16.msra.mxu0 %v138
    %162 = vmatmul.bf16.gmra.mxu0 %v85
    %v163 = vpop.f32.mrf.mxu0
    %v164 = vadd.f32 %v104, %v163
    %v165 = vpop.f32.mrf.mxu0
    %v166 = vadd.f32 %v104, %v165
    %167 = vdwg.mxu0
    %168 = vst.msk [vmem:[#allocation2] sm:$0xff] %vm49, %v164
    %169 = vst.msk [vmem:[#allocation2 + $0x8] sm:$0xff] %vm49, %v166
    // Predicated region
    $region22: #{tpu_custom_call.1} parent=1 // pred_check
      _
    $region23: #{tpu_custom_call.1} parent=1 // pred_check_branch
      %171 = sbr.rel (0) target = $region25
    $region24: #{tpu_custom_call.1} parent=1 // pred_region
      %173 = vsyncadd [#allocation3], 0
      %s174 = sshll.u32 [#allocation2], 4
      %s175 = int_to_ptr.vmem [resolvable:$true] %s174
      %s176 = sshll.u32 %s5, 4
      %s177 = int_to_ptr.hbm [resolvable:$true] %s176
      %182 = dma.vmem_to_hbm [thread:$0]  %s175, 256, %s177, [#allocation3], 128, 128, 8
    $region25: #{tpu_custom_call.1} parent=1 // pred_fallthru
      _
    // Predicated region
    $region26: #{tpu_custom_call.1} parent=1 // pred_check
      _
    $region27: #{tpu_custom_call.1} parent=1 // pred_check_branch
      %184 = sbr.rel (0) target = $region29
    $region28: #{tpu_custom_call.1} parent=1 // pred_region
      %186 = dma.done [#allocation3], 256
    $region29: #{tpu_custom_call.1} parent=1 // pred_fallthru
      _
    %187 = vsyncpa [#allocation3], 1

</llo_original>
